<compile_context>
chip_gen: v6e
topology: v6e:2x2x1
jax: 0.10.0
libtpu: 0.0.40
codegen_flags: <defaults>
</compile_context>

<pallas_src>
import functools
import math

import jax
import jax.numpy as jnp
from jax.experimental import pallas as pl
from jax.experimental.pallas import tpu as pltpu

BN_EPS = 1e-5
# gamma=1, beta=0, running_mean=0, running_var=1  ->  y = x / sqrt(1 + eps)
BN_FOLD_SCALE = 1.0 / math.sqrt(1.0 + BN_EPS)


# ----------------------------------------------------------------------------
# TPU-generation aware tuning knobs
# ----------------------------------------------------------------------------
def _tpu_generation():
    try:
        kind = jax.devices()[0].device_kind.lower()
    except Exception:
        return None
    for g in (7, 6, 5, 4, 3, 2):
        if str(g) in kind:
            return g
    return None


_TPU_GEN = _tpu_generation()
# 512-row tiles hit ~85% of HBM roofline and fit 128 MiB VMEM (v5e/v6e);
# cap at 256 on v7x (64 MiB VMEM) and on unknown hardware.
_ROW_CAP = 512 if _TPU_GEN in (5, 6) else 256
_LANE_CAP = 256                       # fills the 256x256 MXU on v6e/v7x
_GATE_IN_F32 = (_TPU_GEN is not None and _TPU_GEN <= 5)   # no bf16 VALU on v5e
if _TPU_GEN in (5, 6):
    _VMEM_LIMIT = 96 * 1024 * 1024    # 128 MiB physical
elif _TPU_GEN == 7:
    _VMEM_LIMIT = 48 * 1024 * 1024    # 64 MiB physical
else:
    _VMEM_LIMIT = None


def _compiler_params(sem):
    return pltpu.CompilerParams(dimension_semantics=tuple(sem),
                                vmem_limit_bytes=_VMEM_LIMIT)


def _row_tile(dim, cap=None):
    """Largest multiple-of-8 divisor of `dim` that is <= cap (VMEM-bounded).

    Falls back to the full dim only when no such divisor exists (small / odd
    dims), which keeps the block (8,128)-tileable.
    """
    cap = _ROW_CAP if cap is None else cap
    for t in range(min(dim, cap), 7, -1):
        if dim % t == 0 and t % 8 == 0:
            return t
    return dim


def _lane_tile(dim, cap=_LANE_CAP):
    """Largest multiple-of-128 divisor of `dim` <= cap; else the full dim."""
    for t in range(min(dim, cap), 127, -1):
        if dim % t == 0 and t % 128 == 0:
            return t
    return dim


# ----------------------------------------------------------------------------
# PyTorch-equivalent helpers
# ----------------------------------------------------------------------------
def make_divisible(v, divisor, min_value=None):
    if min_value is None:
        min_value = divisor
    new_v = max(min_value, int(v + divisor / 2) // divisor * divisor)
    if new_v < 0.9 * v:
        new_v += divisor
    return new_v


# ----------------------------------------------------------------------------
# Pallas kernels
# ----------------------------------------------------------------------------
def _mm_kernel(x_ref, w_ref, b_ref, o_ref, *, act):
    """Y = act(X @ W + b).  X, W in bf16; accumulate + epilogue in f32."""
    y = jnp.dot(x_ref[...], w_ref[...], preferred_element_type=jnp.float32)
    y = y + b_ref[...]
    if act == "silu":
        y = y * jax.nn.sigmoid(y)
    o_ref[...] = y.astype(o_ref.dtype)


def _mm_res_kernel(x_ref, w_ref, b_ref, r_ref, o_ref, *, act):
    """Y = act(X @ W + b) + residual  (residual fused into the projection)."""
    y = jnp.dot(x_ref[...], w_ref[...], preferred_element_type=jnp.float32)
    y = y + b_ref[...]
    if act == "silu":
        y = y * jax.nn.sigmoid(y)
    y = y + r_ref[...].astype(jnp.float32)
    o_ref[...] = y.astype(o_ref.dtype)


def _proj_gate_kernel(x_ref, g_ref, w_ref, b_ref, o_ref, *, gate_f32):
    """Y = (X * gate) @ W + b.  SE channel-gate fused into the projection."""
    if gate_f32:   # v5e: no bf16 VALU, keep the gate multiply in f32
        xg = (x_ref[...].astype(jnp.float32) * g_ref[...]).astype(jnp.bfloat16)
    else:          # v6e / v7x: gate multiply stays in bf16
        xg = x_ref[...] * g_ref[...]
    y = jnp.dot(xg, w_ref[...], preferred_element_type=jnp.float32)
    y = y + b_ref[...]
    o_ref[...] = y.astype(o_ref.dtype)


def _proj_gate_res_kernel(x_ref, g_ref, w_ref, b_ref, r_ref, o_ref, *, gate_f32):
    if gate_f32:
        xg = (x_ref[...].astype(jnp.float32) * g_ref[...]).astype(jnp.bfloat16)
    else:
        xg = x_ref[...] * g_ref[...]
    y = jnp.dot(xg, w_ref[...], preferred_element_type=jnp.float32)
    y = y + b_ref[...]
    y = y + r_ref[...].astype(jnp.float32)
    o_ref[...] = y.astype(o_ref.dtype)


def _dw_pool_kernel(p_ref, w_ref, b_ref, h_ref, pool_ref, *, inv_hw):
    """Depthwise 3x3 (unrolled per-tap FMA) + bias + SiLU, with the SE
    global-average-pool fused as a second output accumulated over row tiles.

    p_ref   : (9, tm, C) bf16 taps       (leading tap axis -> no sublane pad)
    h_ref   : (tm, C)    bf16 output
    pool_ref: (1, C)     f32 per-batch pooled output (resident across i)
    """
    i = pl.program_id(1)

    acc = p_ref[0].astype(jnp.float32) * w_ref[0]          # (tm, C) * (1, C)
    for k in range(1, 9):                                   # unrolled FMA
        acc = acc + p_ref[k].astype(jnp.float32) * w_ref[k]
    y = acc + b_ref[...]
    y = y * jax.nn.sigmoid(y)                               # SiLU
    h_ref[...] = y.astype(h_ref.dtype)

    @pl.when(i == 0)
    def _():
        pool_ref[...] = jnp.zeros_like(pool_ref)
    pool_ref[...] += jnp.sum(y, axis=0, keepdims=True) * inv_hw


def _se_fc_kernel(p_ref, w1_ref, b1_ref, w2_ref, b2_ref, g_ref):
    """Tiny SE MLP on the pooled (B, C) vector: fc -> SiLU -> fc -> sigmoid."""
    h = jnp.dot(p_ref[...].astype(jnp.bfloat16), w1_ref[...],
                preferred_element_type=jnp.float32) + b1_ref[...]
    h = h * jax.nn.sigmoid(h)
    g = jnp.dot(h.astype(jnp.bfloat16), w2_ref[...],
                preferred_element_type=jnp.float32) + b2_ref[...]
    g_ref[...] = jax.nn.sigmoid(g)


def _head_pool_kernel(x_ref, w_ref, b_ref, o_ref, *, inv_hw):
    """Head 1x1 conv + SiLU + global-average-pool fused: only the pooled
    (1, tn) per-batch vector is emitted, accumulated over the row-tile axis."""
    i = pl.program_id(2)
    y = jnp.dot(x_ref[...], w_ref[...], preferred_element_type=jnp.float32)
    y = y + b_ref[...]
    y = y * jax.nn.sigmoid(y)                               # SiLU
    part = jnp.sum(y, axis=0, keepdims=True) * inv_hw       # (1, tn)

    @pl.when(i == 0)
    def _():
        o_ref[...] = jnp.zeros_like(o_ref)
    o_ref[...] += part


# ----------------------------------------------------------------------------
# Pallas wrappers
# ----------------------------------------------------------------------------
def fused_matmul(x, w, bias, *, act="none", residual=None,
                 out_dtype=jnp.bfloat16):
    """Tiled (M, N) matmul: Y = act(X @ W + b) [+ residual]."""
    M, K = x.shape
    N = w.shape[1]
    tm = _row_tile(M)
    tn = _lane_tile(N)
    grid = (M // tm, N // tn)

    x = x.astype(jnp.bfloat16)
    w = w.astype(jnp.bfloat16)
    b2 = bias.reshape(1, N).astype(jnp.float32)

    in_specs = [
        pl.BlockSpec((tm, K), lambda i, j: (i, 0)),
        pl.BlockSpec((K, tn), lambda i, j: (0, j)),
        pl.BlockSpec((1, tn), lambda i, j: (0, j)),
    ]
    args = [x, w, b2]
    if residual is not None:
        in_specs.append(pl.BlockSpec((tm, tn), lambda i, j: (i, j)))
        args.append(residual.astype(jnp.bfloat16))
        kernel = functools.partial(_mm_res_kernel, act=act)
    else:
        kernel = functools.partial(_mm_kernel, act=act)

    return pl.pallas_call(
        kernel,
        out_shape=jax.ShapeDtypeStruct((M, N), out_dtype),
        grid=grid,
        in_specs=in_specs,
        out_specs=pl.BlockSpec((tm, tn), lambda i, j: (i, j)),
        compiler_params=_compiler_params(("parallel", "parallel")),
    )(*args)


def _conv_taps(x, stride):
    """The 9 shifted taps of a padded 3x3 window (plain-JAX glue).

    Returns a list of 9 arrays, each [B, Ho, Wo, C]."""
    B, H, W, C = x.shape
    xp = jnp.pad(x, ((0, 0), (1, 1), (1, 1), (0, 0)))
    Ho = (H + 2 - 3) // stride + 1
    Wo = (W + 2 - 3) // stride + 1
    taps = []
    for dh in range(3):
        for dw in range(3):
            taps.append(
                xp[:, dh:dh + stride * (Ho - 1) + 1:stride,
                      dw:dw + stride * (Wo - 1) + 1:stride, :]
            )
    return taps, Ho, Wo


def conv3x3_bn_silu(x, w, bias, stride):
    """Dense 3x3 conv (+ folded BN + SiLU) via im2col -> one MXU matmul."""
    B, H, W, C = x.shape
    taps, Ho, Wo = _conv_taps(x, stride)
    patches = jnp.stack(taps, axis=3)             # [B, Ho, Wo, 9, C]
    xm = patches.reshape(B * Ho * Wo, 9 * C)      # C stays the minor (lane) dim
    y = fused_matmul(xm, w, bias, act="silu")
    return y.reshape(B, Ho, Wo, -1)


def conv1x1(x, w, bias, act, residual=None):
    B, H, W, C = x.shape
    r = residual.reshape(B * H * W, -1) if residual is not None else None
    y = fused_matmul(x.reshape(B * H * W, C), w, bias, act=act, residual=r)
    return y.reshape(B, H, W, -1)


def dwconv3x3_silu_pool(x, w, bias, stride):
    """Depthwise 3x3 conv + folded BN + SiLU, with the SE global-average-pool
    fused in.  Returns (h [B,Ho,Wo,C] bf16, pooled [B,C] f32)."""
    B, H, W, C = x.shape
    taps, Ho, Wo = _conv_taps(x, stride)
    HW = Ho * Wo
    # Taps on a leading (non-tiled) axis -> clean (tm, C) 2-D blocks per tap.
    p = jnp.stack(taps, axis=1).reshape(B, 9, HW, C).astype(jnp.bfloat16)
    tm = _row_tile(HW)
    grid = (B, HW // tm)

    kernel = functools.partial(_dw_pool_kernel, inv_hw=1.0 / float(HW))
    h, pooled = pl.pallas_call(
        kernel,
        out_shape=(jax.ShapeDtypeStruct((B, HW, C), jnp.bfloat16),
                   jax.ShapeDtypeStruct((B, 1, C), jnp.float32)),
        grid=grid,
        in_specs=[
            pl.BlockSpec((None, 9, tm, C), lambda b, i: (b, 0, i, 0)),
            pl.BlockSpec((9, 1, C), lambda b, i: (0, 0, 0)),
            pl.BlockSpec((1, C), lambda b, i: (0, 0)),
        ],
        out_specs=(
            pl.BlockSpec((None, tm, C), lambda b, i: (b, i, 0)),
            pl.BlockSpec((None, 1, C), lambda b, i: (b, 0, 0)),
        ),
        compiler_params=_compiler_params(("parallel", "arbitrary")),
    )(p, w.astype(jnp.float32), bias.reshape(1, C).astype(jnp.float32))
    return h.reshape(B, Ho, Wo, C), pooled.reshape(B, C)


def se_fc(pooled, w1, b1, w2, b2):
    """SE gate MLP on the already-pooled (B, C) vector (tiny)."""
    B, C = pooled.shape
    Cr = w1.shape[1]
    return pl.pallas_call(
        _se_fc_kernel,
        out_shape=jax.ShapeDtypeStruct((B, C), jnp.float32),
        grid=(1,),
        in_specs=[
            pl.BlockSpec((B, C), lambda i: (0, 0)),
            pl.BlockSpec((C, Cr), lambda i: (0, 0)),
            pl.BlockSpec((1, Cr), lambda i: (0, 0)),
            pl.BlockSpec((Cr, C), lambda i: (0, 0)),
            pl.BlockSpec((1, C), lambda i: (0, 0)),
        ],
        out_specs=pl.BlockSpec((B, C), lambda i: (0, 0)),
        compiler_params=_compiler_params(("arbitrary",)),
    )(pooled, w1.astype(jnp.bfloat16), b1.reshape(1, Cr).astype(jnp.float32),
      w2.astype(jnp.bfloat16), b2.reshape(1, C).astype(jnp.float32))


def se_project(x, gate, w, bias, residual=None):
    """Projection 1x1 conv with the SE gate (and optional residual) fused in.
    Leading batch dim is squeezed so the kernel works on clean 2-D refs."""
    B, H, W, K = x.shape
    HW = H * W
    N = w.shape[1]
    tm = _row_tile(HW)
    tn = _lane_tile(N)
    grid = (B, HW // tm, N // tn)

    xr = x.reshape(B, HW, K).astype(jnp.bfloat16)
    gdtype = jnp.float32 if _GATE_IN_F32 else jnp.bfloat16
    g = gate.reshape(B, 1, K).astype(gdtype)
    b2 = bias.reshape(1, N).astype(jnp.float32)

    in_specs = [
        pl.BlockSpec((None, tm, K), lambda b, i, j: (b, i, 0)),
        pl.BlockSpec((None, 1, K), lambda b, i, j: (b, 0, 0)),
        pl.BlockSpec((K, tn), lambda b, i, j: (0, j)),
        pl.BlockSpec((1, tn), lambda b, i, j: (0, j)),
    ]
    args = [xr, g, w.astype(jnp.bfloat16), b2]
    if residual is not None:
        in_specs.append(pl.BlockSpec((None, tm, tn), lambda b, i, j: (b, i, j)))
        args.append(residual.reshape(B, HW, N).astype(jnp.bfloat16))
        kernel = functools.partial(_proj_gate_res_kernel, gate_f32=_GATE_IN_F32)
    else:
        kernel = functools.partial(_proj_gate_kernel, gate_f32=_GATE_IN_F32)

    y = pl.pallas_call(
        kernel,
        out_shape=jax.ShapeDtypeStruct((B, HW, N), jnp.bfloat16),
        grid=grid,
        in_specs=in_specs,
        out_specs=pl.BlockSpec((None, tm, tn), lambda b, i, j: (b, i, j)),
        compiler_params=_compiler_params(("parallel", "parallel", "parallel")),
    )(*args)
    return y.reshape(B, H, W, N)


def head_conv_pool(x, w, bias):
    """Head 1x1 conv + BN + SiLU + global-average-pool in one kernel; only the
    pooled (B, N) features ever touch HBM."""
    B, H, W, K = x.shape
    HW = H * W
    N = w.shape[1]
    tm = _row_tile(HW)
    tn = _lane_tile(N)
    grid = (B, N // tn, HW // tm)     # row-tile reduction axis last

    xr = x.reshape(B, HW, K).astype(jnp.bfloat16)
    kernel = functools.partial(_head_pool_kernel, inv_hw=1.0 / float(HW))
    pooled = pl.pallas_call(
        kernel,
        out_shape=jax.ShapeDtypeStruct((B, 1, N), jnp.float32),
        grid=grid,
        in_specs=[
            pl.BlockSpec((None, tm, K), lambda b, j, i: (b, i, 0)),
            pl.BlockSpec((K, tn), lambda b, j, i: (0, j)),
            pl.BlockSpec((1, tn), lambda b, j, i: (0, j)),
        ],
        out_specs=pl.BlockSpec((None, 1, tn), lambda b, j, i: (b, 0, j)),
        compiler_params=_compiler_params(("parallel", "parallel", "arbitrary")),
    )(xr, w.astype(jnp.bfloat16), bias.reshape(1, N).astype(jnp.float32))
    return pooled.reshape(B, N)


# ----------------------------------------------------------------------------
# Parameter initialization (matches nn.Module.initialize_weights semantics,
# with the inference-mode BN scale folded into the conv weights)
# ----------------------------------------------------------------------------
def build_model(key, cfgs, in_channel, num_classes=10, width_multiplier=1.0):
    keys = iter(jax.random.split(key, 1024))
    nkey = lambda: next(keys)

    def conv_w(kh, kw, cin, cout):
        std = math.sqrt(2.0 / (kh * kw * cout))
        w = jax.random.normal(nkey(), (kh, kw, cin, cout), jnp.float32) * std
        w = w * BN_FOLD_SCALE                       # fold BN scale into weights
        return w.reshape(kh * kw * cin, cout).astype(jnp.bfloat16)

    def dw_w(cin):  # depthwise 3x3, groups == channels
        std = math.sqrt(2.0 / (3 * 3 * cin))
        w = jax.random.normal(nkey(), (3, 3, cin), jnp.float32) * std
        return (w * BN_FOLD_SCALE).reshape(9, 1, cin)   # f32, tap-major

    def lin_w(cin, cout):
        w = jax.random.normal(nkey(), (cin, cout), jnp.float32) * 0.001
        return w.astype(jnp.bfloat16)

    def zero_bias(c):
        return jnp.zeros((c,), jnp.float32)

    layers = []
    input_channel = make_divisible(24 * width_multiplier, 8)
    # stem: conv3x3 stride 2 + BN + SiLU
    layers.append(dict(kind="conv3x3", stride=2,
                       w=conv_w(3, 3, in_channel, input_channel),
                       b=zero_bias(input_channel)))
    for t, c, n, s, use_se in cfgs:
        output_channel = make_divisible(c * width_multiplier, 8)
        for i in range(n):
            stride = s if i == 0 else 1
            hidden = round(input_channel * t)
            blk = dict(kind="mbconv", use_se=bool(use_se), stride=stride,
                       identity=(stride == 1 and input_channel == output_channel))
            if use_se:
                red = make_divisible(input_channel // 4, 8)
                blk["expand_w"] = conv_w(1, 1, input_channel, hidden)
                blk["expand_b"] = zero_bias(hidden)
                blk["dw_w"] = dw_w(hidden)
                blk["dw_b"] = zero_bias(hidden)
                blk["se_w1"] = lin_w(hidden, red)
                blk["se_b1"] = zero_bias(red)
                blk["se_w2"] = lin_w(red, hidden)
                blk["se_b2"] = zero_bias(hidden)
                blk["proj_w"] = conv_w(1, 1, hidden, output_channel)
                blk["proj_b"] = zero_bias(output_channel)
            else:
                blk["fused_w"] = conv_w(3, 3, input_channel, hidden)
                blk["fused_b"] = zero_bias(hidden)
                blk["proj_w"] = conv_w(1, 1, hidden, output_channel)
                blk["proj_b"] = zero_bias(output_channel)
            layers.append(blk)
            input_channel = output_channel

    out_c = make_divisible(1792 * width_multiplier, 8) if width_multiplier > 1.0 else 1792
    head = dict(conv_w=conv_w(1, 1, input_channel, out_c),
                conv_b=zero_bias(out_c),
                cls_w=lin_w(out_c, num_classes),
                cls_b=zero_bias(num_classes))
    return layers, head


# ----------------------------------------------------------------------------
# Forward pass
# ----------------------------------------------------------------------------
def efficientnetv2_forward(layers, head, x_nchw):
    # NCHW -> NHWC once; keep activations bf16 end-to-end.
    x = jnp.transpose(x_nchw, (0, 2, 3, 1)).astype(jnp.bfloat16)
    for lyr in layers:
        if lyr["kind"] == "conv3x3":
            x = conv3x3_bn_silu(x, lyr["w"], lyr["b"], lyr["stride"])
        else:
            res = x if lyr["identity"] else None
            if lyr["use_se"]:
                h = conv1x1(x, lyr["expand_w"], lyr["expand_b"], act="silu")
                h, pooled = dwconv3x3_silu_pool(h, lyr["dw_w"], lyr["dw_b"],
                                                lyr["stride"])
                gate = se_fc(pooled, lyr["se_w1"], lyr["se_b1"],
                             lyr["se_w2"], lyr["se_b2"])
                x = se_project(h, gate, lyr["proj_w"], lyr["proj_b"],
                               residual=res)
            else:
                h = conv3x3_bn_silu(x, lyr["fused_w"], lyr["fused_b"],
                                    lyr["stride"])
                x = conv1x1(h, lyr["proj_w"], lyr["proj_b"], act="none",
                            residual=res)
    # head: 1x1 conv + BN + SiLU + global avg pool fused, then classifier
    pooled = head_conv_pool(x, head["conv_w"], head["conv_b"])   # [B, 1792] f32
    logits = fused_matmul(pooled, head["cls_w"], head["cls_b"],
                          act="none", out_dtype=jnp.float32)
    return logits


# ----------------------------------------------------------------------------
# Demo
# ----------------------------------------------------------------------------
if __name__ == "__main__":
    # small EfficientNetV2-style config: (expand_ratio, channels, repeats, stride, use_se)
    CFGS = [
        [1, 24, 1, 1, 0],
        [4, 32, 1, 2, 0],
        [4, 48, 2, 2, 1],   # second repeat has stride 1 -> SE block w/ residual
    ]
    key = jax.random.PRNGKey(0)
    pkey, xkey = jax.random.split(key)
    layers, head = build_model(pkey, CFGS, in_channel=3, num_classes=10,
                               width_multiplier=1.0)

    x = jax.random.normal(xkey, (2, 3, 32, 32), jnp.float32)  # NCHW like PyTorch

    logits = efficientnetv2_forward(layers, head, x)
    logits = jax.block_until_ready(logits)
    assert logits.shape == (2, 10)
    assert bool(jnp.all(jnp.isfinite(logits)))
    print("KERNEL_OK")
</pallas_src>

<mosaic_0001>
module attributes {stable_mosaic.version = 11 : i64} {
  func.func @_mm_kernel(%arg0: i32, %arg1: i32, %arg2: memref<256x27xbf16, #tpu.memory_space<vmem>>, %arg3: memref<27x24xbf16, #tpu.memory_space<vmem>>, %arg4: memref<1x24xf32, #tpu.memory_space<vmem>>, %arg5: memref<256x24xbf16, #tpu.memory_space<vmem>>) attributes {dimension_semantics = [#tpu.dimension_semantics<parallel>, #tpu.dimension_semantics<parallel>], iteration_bounds = array<i64: 2, 1>, scalar_prefetch = 0 : i64, scratch_operands = 0 : i64, tpu.core_type = #tpu.core_type<tc>, window_params = [{transform_indices = @transform_0, window_bounds = array<i64: 256, 27>}, {transform_indices = @transform_1, window_bounds = array<i64: 27, 24>}, {transform_indices = @transform_2, window_bounds = array<i64: 1, 24>}, {transform_indices = @transform_3, window_bounds = array<i64: 256, 24>}]} {
    %c0 = arith.constant 0 : index
    %c0_0 = arith.constant 0 : index
    %0 = vector.load %arg2[%c0, %c0_0] : memref<256x27xbf16, #tpu.memory_space<vmem>>, vector<256x27xbf16>
    %c0_1 = arith.constant 0 : index
    %c0_2 = arith.constant 0 : index
    %1 = vector.load %arg3[%c0_1, %c0_2] : memref<27x24xbf16, #tpu.memory_space<vmem>>, vector<27x24xbf16>
    %cst = arith.constant dense<0.000000e+00> : vector<256x24xf32>
    %2 = tpu.matmul %0, %1, %cst {dimension_numbers = #tpu.dot_dimension_numbers<[1], [0], [0], [1], [0, 0, 1, 1], [], []>} : vector<256x27xbf16>, vector<27x24xbf16>, vector<256x24xf32> -> vector<256x24xf32>
    %c0_3 = arith.constant 0 : index
    %c0_4 = arith.constant 0 : index
    %3 = vector.load %arg4[%c0_3, %c0_4] : memref<1x24xf32, #tpu.memory_space<vmem>>, vector<1x24xf32>
    %4 = vector.broadcast %3 : vector<1x24xf32> to vector<256x24xf32>
    %5 = arith.addf %2, %4 : vector<256x24xf32>
    %6 = arith.negf %5 : vector<256x24xf32>
    %7 = math.exp %6 : vector<256x24xf32>
    %cst_5 = arith.constant 1.000000e+00 : f32
    %8 = vector.broadcast %cst_5 : f32 to vector<256x24xf32>
    %9 = arith.addf %8, %7 : vector<256x24xf32>
    %10 = arith.divf %8, %9 : vector<256x24xf32>
    %11 = arith.mulf %5, %10 : vector<256x24xf32>
    %12 = arith.truncf %11 : vector<256x24xf32> to vector<256x24xbf16>
    %c0_6 = arith.constant 0 : index
    %c0_7 = arith.constant 0 : index
    %13 = vector.load %arg5[%c0_6, %c0_7] : memref<256x24xbf16, #tpu.memory_space<vmem>>, vector<256x24xbf16>
    tpu.vector_store %arg5[%c0_6, %c0_7], %12 {strides = array<i32>} : memref<256x24xbf16, #tpu.memory_space<vmem>>, vector<256x24xbf16>,
    return
  }
  func.func @transform_0(%arg0: i32, %arg1: i32) -> (i32, i32) {
    %c0_i32 = arith.constant 0 : i32
    %c0_i32_0 = arith.constant 0 : i32
    return %arg0, %c0_i32 : i32, i32
  }
  func.func @transform_1(%arg0: i32, %arg1: i32) -> (i32, i32) {
    %c0_i32 = arith.constant 0 : i32
    %c0_i32_0 = arith.constant 0 : i32
    return %c0_i32, %arg1 : i32, i32
  }
  func.func @transform_2(%arg0: i32, %arg1: i32) -> (i32, i32) {
    %c0_i32 = arith.constant 0 : i32
    %c0_i32_0 = arith.constant 0 : i32
    return %c0_i32, %arg1 : i32, i32
  }
  func.func @transform_3(%arg0: i32, %arg1: i32) -> (i32, i32) {
    %c0_i32 = arith.constant 0 : i32
    return %arg0, %arg1 : i32, i32
  }
}

</mosaic_0001>

<llo_original>
// kernel: tpu_custom_call.1
$region0: #{tpu_custom_call.1}
  #allocation0 [shape = 'u32[]', space=smem, size = 0x4, offset = 0x4, fixed_abs, tag = 'smem constant byte address 0x4 - core index']
  #allocation1 [shape = 'u32[144,128]{1,0:T(1,128)}', space=vmem, size = 0x12000, scoped, tag = 'internal scratch']
  %s0 = inlined_call_operand.vmem [shape: bf16[512,27], index: 0, kind: input, shape index: {}]
  %s1 = inlined_call_operand.vmem [shape: bf16[27,24], index: 1, kind: input, shape index: {}]
  %s2 = inlined_call_operand.vmem [shape: f32[1,24], index: 2, kind: input, shape index: {}]
  %s3 = inlined_call_operand.vmem [shape: bf16[512,24], index: 3, kind: output, shape index: {}]
  %s4 = sld [smem:[#allocation0]]
  $region45: #{tpu_custom_call.1} parent=0
    _
  %s6 = ssub.s32 1, %s4
  %s7 = scalar_select 0, %s6, %s4
  loop: start=0, step=1, limit=4
  $region2: #{tpu_custom_call.1} parent=0 // loop_pre_header
    _
  $region3: #{tpu_custom_call.1} parent=0 // loop_header
    %s9 = sphi 0, %s13
    %p10 = scmp.ge.s32.totalorder %s9, 4
    %s16 = sphi 0, %s28
    %s17 = sphi 0, %s24
    %s18 = sphi 0, %s16
    %s19 = sphi 0, %s17
    %s20 = sphi 0, %s18
    %s21 = sphi 0, %s19
    %s31 = sphi 0, %s33
    %s34 = sphi 0, %s31
    %s35 = sphi 0, %s34
    %s51 = sphi 0, %s35
    %s57 = sphi 0, %s59
    %s60 = sphi 0, %s57
    %s61 = sphi 0, %s60
    %s77 = sphi 0, %s61
    %s83 = sphi 0, %s85
    %s86 = sphi 0, %s83
    %s87 = sphi 0, %s86
    %s103 = sphi 0, %s87
    %s111 = sphi 0, %s113
    %s114 = sphi 0, %s111
    %s115 = sphi 0, %s114
    %s131 = sphi 0, %s115
  $region4: #{tpu_custom_call.1} parent=0 // loop_header_branch
    %12 = sbr.rel (%p10) target = $region8
  $region5: #{tpu_custom_call.1} parent=0 // loop_body
    %s14 = ssub.s32 %s9, 1
    %s15 = ssub.s32 %s9, 2
    %s22 = sadd.s32 1, %s17
    %p23 = scmp.ge.s32.totalorder %s22, 1
    %s24 = scalar_select %p23, 0, %s22
    %s25 = sadd.s32 1, %s16
    %s26 = scalar_select %p23, %s25, %s16
    %p27 = scmp.ge.s32.totalorder %s26, 2
    %s28 = scalar_select %p27, 0, %s26
    %s29 = ssub.s32 %s16, %s28
    %p30 = scmp.eq.s32.totalorder %s29, 0
    %s32 = sadd.s32 %s31, 1
    %s33 = scalar_select %p30, %s31, %s32
    %p36 = pneg %p30
    %p37 = scmp.eq.s32.totalorder %s9, 1
    %p38 = por %p36, %p37
    %p39 = scmp.ne.s32.totalorder %s31, %s34
    %p40 = scmp.eq.s32.totalorder %s9, 0
    %p41 = por %p39, %p40
    %p42 = scmp.ne.s32.totalorder %s31, %s34
    %p43 = scmp.eq.s32.totalorder %s14, 1
    %p44 = por %p42, %p43
    %p45 = scmp.ne.s32.totalorder %s34, %s35
    %p46 = scmp.eq.s32.totalorder %s14, 0
    %p47 = por %p45, %p46
    %p48 = scmp.ne.s32.totalorder %s34, %s35
    %p49 = scmp.eq.s32.totalorder %s15, 1
    %p50 = por %p48, %p49
    %p52 = scmp.ne.s32.totalorder %s35, %s51
    %p53 = scmp.eq.s32.totalorder %s15, 0
    %p54 = por %p52, %p53
    %s55 = ssub.s32 %s17, %s24
    %p56 = scmp.eq.s32.totalorder %s55, 0
    %s58 = sadd.s32 %s57, 1
    %s59 = scalar_select %p56, %s57, %s58
    %p62 = pneg %p56
    %p63 = scmp.eq.s32.totalorder %s9, 1
    %p64 = por %p62, %p63
    %p65 = scmp.ne.s32.totalorder %s57, %s60
    %p66 = scmp.eq.s32.totalorder %s9, 0
    %p67 = por %p65, %p66
    %p68 = scmp.ne.s32.totalorder %s57, %s60
    %p69 = scmp.eq.s32.totalorder %s14, 1
    %p70 = por %p68, %p69
    %p71 = scmp.ne.s32.totalorder %s60, %s61
    %p72 = scmp.eq.s32.totalorder %s14, 0
    %p73 = por %p71, %p72
    %p74 = scmp.ne.s32.totalorder %s60, %s61
    %p75 = scmp.eq.s32.totalorder %s15, 1
    %p76 = por %p74, %p75
    %p78 = scmp.ne.s32.totalorder %s61, %s77
    %p79 = scmp.eq.s32.totalorder %s15, 0
    %p80 = por %p78, %p79
    %s81 = ssub.s32 %s17, %s24
    %p82 = scmp.eq.s32.totalorder %s81, 0
    %s84 = sadd.s32 %s83, 1
    %s85 = scalar_select %p82, %s83, %s84
    %p88 = pneg %p82
    %p89 = scmp.eq.s32.totalorder %s9, 1
    %p90 = por %p88, %p89
    %p91 = scmp.ne.s32.totalorder %s83, %s86
    %p92 = scmp.eq.s32.totalorder %s9, 0
    %p93 = por %p91, %p92
    %p94 = scmp.ne.s32.totalorder %s83, %s86
    %p95 = scmp.eq.s32.totalorder %s14, 1
    %p96 = por %p94, %p95
    %p97 = scmp.ne.s32.totalorder %s86, %s87
    %p98 = scmp.eq.s32.totalorder %s14, 0
    %p99 = por %p97, %p98
    %p100 = scmp.ne.s32.totalorder %s86, %s87
    %p101 = scmp.eq.s32.totalorder %s15, 1
    %p102 = por %p100, %p101
    %p104 = scmp.ne.s32.totalorder %s87, %s103
    %p105 = scmp.eq.s32.totalorder %s15, 0
    %p106 = por %p104, %p105
    %s107 = ssub.s32 %s16, %s28
    %s108 = ssub.s32 %s17, %s24
    %s109 = sor.u32 %s107, %s108
    %p110 = scmp.eq.s32.totalorder %s109, 0
    %s112 = sadd.s32 %s111, 1
    %s113 = scalar_select %p110, %s111, %s112
    %p116 = pneg %p110
    %p117 = scmp.eq.s32.totalorder %s9, 1
    %p118 = por %p116, %p117
    %p119 = scmp.ne.s32.totalorder %s111, %s114
    %p120 = scmp.eq.s32.totalorder %s9, 0
    %p121 = por %p119, %p120
    %p122 = scmp.ne.s32.totalorder %s111, %s114
    %p123 = scmp.eq.s32.totalorder %s14, 1
    %p124 = por %p122, %p123
    %p125 = scmp.ne.s32.totalorder %s114, %s115
    %p126 = scmp.eq.s32.totalorder %s14, 0
    %p127 = por %p125, %p126
    %p128 = scmp.ne.s32.totalorder %s114, %s115
    %p129 = scmp.eq.s32.totalorder %s15, 1
    %p130 = por %p128, %p129
    %p132 = scmp.ne.s32.totalorder %s115, %s131
    %p133 = scmp.eq.s32.totalorder %s15, 0
    %p134 = por %p132, %p133
    %p135 = scmp.le.s32.totalorder 1, %s9
    %p136 = scmp.lt.s32.totalorder %s9, 3
    %p137 = pnand %p135, %p136
    %p138 = pneg %p137
    // Predicated region
    $region9: #{tpu_custom_call.1} parent=5 // pred_check
      _
    $region10: #{tpu_custom_call.1} parent=5 // pred_check_branch
      %140 = sbr.rel (%p137) target = $region12
    $region11: #{tpu_custom_call.1} parent=5 // pred_region
      %s141 = ssub.s32 %s9, 1
      // Predicated region
      $region13: #{tpu_custom_call.1} parent=11 // pred_check
        %p142 = pneg %p73
      $region14: #{tpu_custom_call.1} parent=11 // pred_check_branch
        %144 = sbr.rel (%p142) target = $region16
      $region15: #{tpu_custom_call.1} parent=11 // pred_region
        %p145 = scmp.lt.s32.totalorder %s19, 0
        %s146 = scalar_select %p145, %s19, 0
        %s147 = smul.addr %s146, 4
        %s148 = scalar_lea.vmem %s1, %s147
      $region16: #{tpu_custom_call.1} parent=11 // pred_fallthru
        _
      // Predicated region
      $region17: #{tpu_custom_call.1} parent=11 // pred_check
        %p149 = pneg %p99
      $region18: #{tpu_custom_call.1} parent=11 // pred_check_branch
        %151 = sbr.rel (%p149) target = $region20
      $region19: #{tpu_custom_call.1} parent=11 // pred_region
        %p152 = scmp.lt.s32.totalorder %s19, 0
        %s153 = scalar_select %p152, %s19, 0
        %s154 = scalar_lea.vmem %s2, %s153
      $region20: #{tpu_custom_call.1} parent=11 // pred_fallthru
        _
    $region12: #{tpu_custom_call.1} parent=5 // pred_fallthru
      _
    %p155 = scmp.lt.s32.totalorder %s9, 2
    // Predicated region
    $region21: #{tpu_custom_call.1} parent=5 // pred_check
      %p156 = pneg %p155
    $region22: #{tpu_custom_call.1} parent=5 // pred_check_branch
      %158 = sbr.rel (%p156) target = $region24
    $region23: #{tpu_custom_call.1} parent=5 // pred_region
      // Predicated region
      $region25: #{tpu_custom_call.1} parent=23 // pred_check
        %p159 = pneg %p41
      $region26: #{tpu_custom_call.1} parent=23 // pred_check_branch
        %161 = sbr.rel (%p159) target = $region28
      $region27: #{tpu_custom_call.1} parent=23 // pred_region
        %s162 = smul.u32 32, %s16
        %p163 = scmp.lt.s32.totalorder %s162, 63
        %s164 = scalar_select %p163, %s162, 63
        %s165 = smul.addr %s164, 4
        %s166 = scalar_lea.vmem %s0, %s165
        %s167 = smul.u32 32, %s16
      $region28: #{tpu_custom_call.1} parent=23 // pred_fallthru
        _
    $region24: #{tpu_custom_call.1} parent=5 // pred_fallthru
      _
    %p168 = scmp.le.s32.totalorder 1, %s9
    %p169 = scmp.lt.s32.totalorder %s9, 3
    %p170 = pnand %p168, %p169
    %p171 = pneg %p170
    // Predicated region
    $region29: #{tpu_custom_call.1} parent=5 // pred_check
      _
    $region30: #{tpu_custom_call.1} parent=5 // pred_check_branch
      %173 = sbr.rel (%p170) target = $region32
    $region31: #{tpu_custom_call.1} parent=5 // pred_region
      %s174 = ssub.s32 %s9, 1
      %s175 = smul.u32 32, %s18
      %p176 = scmp.lt.s32.totalorder %s175, 63
      %s177 = scalar_select %p176, %s175, 63
      %s178 = smul.addr %s177, 4
      %s179 = scalar_lea.vmem %s0, %s178
      %p180 = pneg %p47
      %p181 = pneg %p44
      %p182 = scmp.lt.s32.totalorder %s19, 0
      %s183 = scalar_select %p182, %s19, 0
      %s184 = smul.addr %s183, 4
      %s185 = scalar_lea.vmem %s1, %s184
      %p186 = pneg %p73
      %p187 = pneg %p70
      %p188 = scmp.lt.s32.totalorder %s19, 0
      %s189 = scalar_select %p188, %s19, 0
      %s190 = scalar_lea.vmem %s2, %s189
      %p191 = pneg %p99
      %p192 = pneg %p96
      %p193 = pneg %p127
      %p194 = pneg %p124
      %s195 = smul.u32 32, %s18
      %p196 = scmp.lt.s32.totalorder %s195, 63
      %s197 = scalar_select %p196, %s195, 63
      %p198 = scmp.lt.s32.totalorder %s19, 0
      %s199 = scalar_select %p198, %s19, 0
      %s200 = sadd.s32 %s199, %s197
      %s201 = smul.addr %s200, 4
      %s202 = scalar_lea.vmem %s3, %s201
      %s203 = smul.u32 32, %s18
      %p204 = scmp.lt.s32.totalorder %s203, 63
      %s205 = scalar_select %p204, %s203, 63
      %s206 = smul.addr %s205, 4
      %s207 = scalar_lea.vmem %s0, %s206
      %s208 = smul.u32 32, %s18
      %p209 = scmp.lt.s32.totalorder %s19, 0
      %s210 = scalar_select %p209, %s19, 0
      %s211 = smul.addr %s210, 4
      %s212 = scalar_lea.vmem %s1, %s211
      %p213 = scmp.lt.s32.totalorder %s19, 0
      %s214 = scalar_select %p213, %s19, 0
      %s215 = scalar_lea.vmem %s2, %s214
      %s216 = smul.u32 32, %s18
      %p217 = scmp.lt.s32.totalorder %s216, 63
      %s218 = scalar_select %p217, %s216, 63
      %p219 = scmp.lt.s32.totalorder %s19, 0
      %s220 = scalar_select %p219, %s19, 0
      %s221 = sadd.s32 %s220, %s218
      %s222 = smul.addr %s221, 4
      %s223 = scalar_lea.vmem %s3, %s222
      %s224 = smul.u32 32, %s18
      %v226 = vld [vmem:[%s207] sm:$0xf]
      %v227 = vld [vmem:[%s207 + $0x4] sm:$0xf]
      %v228 = vld [vmem:[%s207 + $0x8] sm:$0xf]
      %v229 = vld [vmem:[%s207 + $0xc] sm:$0xf]
      %v230 = vld [vmem:[%s207 + $0x10] sm:$0xf]
      %v231 = vld [vmem:[%s207 + $0x14] sm:$0xf]
      %v232 = vld [vmem:[%s207 + $0x18] sm:$0xf]
      %v233 = vld [vmem:[%s207 + $0x1c] sm:$0xf]
      %v234 = vld [vmem:[%s207 + $0x20] sm:$0xf]
      %v235 = vld [vmem:[%s207 + $0x24] sm:$0xf]
      %v236 = vld [vmem:[%s207 + $0x28] sm:$0xf]
      %v237 = vld [vmem:[%s207 + $0x2c] sm:$0xf]
      %v238 = vld [vmem:[%s207 + $0x30] sm:$0xf]
      %v239 = vld [vmem:[%s207 + $0x34] sm:$0xf]
      %v240 = vld [vmem:[%s207 + $0x38] sm:$0xf]
      %v241 = vld [vmem:[%s207 + $0x3c] sm:$0xf]
      %v242 = vld [vmem:[%s207 + $0x40] sm:$0xf]
      %v243 = vld [vmem:[%s207 + $0x44] sm:$0xf]
      %v244 = vld [vmem:[%s207 + $0x48] sm:$0xf]
      %v245 = vld [vmem:[%s207 + $0x4c] sm:$0xf]
      %v246 = vld [vmem:[%s207 + $0x50] sm:$0xf]
      %v247 = vld [vmem:[%s207 + $0x54] sm:$0xf]
      %v248 = vld [vmem:[%s207 + $0x58] sm:$0xf]
      %v249 = vld [vmem:[%s207 + $0x5c] sm:$0xf]
      %v250 = vld [vmem:[%s207 + $0x60] sm:$0xf]
      %v251 = vld [vmem:[%s207 + $0x64] sm:$0xf]
      %v252 = vld [vmem:[%s207 + $0x68] sm:$0xf]
      %v253 = vld [vmem:[%s207 + $0x6c] sm:$0xf]
      %v254 = vld [vmem:[%s207 + $0x70] sm:$0xf]
      %v255 = vld [vmem:[%s207 + $0x74] sm:$0xf]
      %v256 = vld [vmem:[%s207 + $0x78] sm:$0xf]
      %v257 = vld [vmem:[%s207 + $0x7c] sm:$0xf]
      %v258 = vld [vmem:[%s212] sm:$0xf]
      %v259 = vld [vmem:[%s212 + $0x4] sm:$0xf]
      %v260 = vld [vmem:[%s212 + $0x8] sm:$0xf]
      %v261 = vld [vmem:[%s212 + $0xc] sm:$0x3]
      %v262 = vld [vmem:[%s215] sm:$0x1]
      %v264 = vlaneseq
      %v265 = vshrl.u32 %v264, 7
      %v266 = vsub.s32 0, %v265
      %v267 = vrot.slane %v262, %v266
      %v301 = vunpack.c.l.b16 %v226
      %v302 = vunpack.c.l.b16 %v227
      %v303 = vunpack.c.l.b16 %v228
      %v304 = vunpack.c.l.b16 %v229
      %v305 = vunpack.c.l.b16 %v230
      %v306 = vunpack.c.l.b16 %v231
      %v307 = vunpack.c.l.b16 %v232
      %v308 = vunpack.c.l.b16 %v233
      %v309 = vunpack.c.l.b16 %v234
      %v310 = vunpack.c.l.b16 %v235
      %v311 = vunpack.c.l.b16 %v236
      %v312 = vunpack.c.l.b16 %v237
      %v313 = vunpack.c.l.b16 %v238
      %v314 = vunpack.c.l.b16 %v239
      %v315 = vunpack.c.l.b16 %v240
      %v316 = vunpack.c.l.b16 %v241
      %v317 = vunpack.c.l.b16 %v242
      %v318 = vunpack.c.l.b16 %v243
      %v319 = vunpack.c.l.b16 %v244
      %v320 = vunpack.c.l.b16 %v245
      %v321 = vunpack.c.l.b16 %v246
      %v322 = vunpack.c.l.b16 %v247
      %v323 = vunpack.c.l.b16 %v248
      %v324 = vunpack.c.l.b16 %v249
      %v325 = vunpack.c.l.b16 %v250
      %v326 = vunpack.c.l.b16 %v251
      %v327 = vunpack.c.l.b16 %v252
      %v328 = vunpack.c.l.b16 %v253
      %v329 = vunpack.c.l.b16 %v254
      %v330 = vunpack.c.l.b16 %v255
      %v331 = vunpack.c.l.b16 %v256
      %v332 = vunpack.c.l.b16 %v257
      %v333 = vpack.c.b16 %v302, %v301
      %v334 = vpack.c.b16 %v304, %v303
      %v335 = vpack.c.b16 %v306, %v305
      %v336 = vpack.c.b16 %v308, %v307
      %v337 = vpack.c.b16 %v310, %v309
      %v338 = vpack.c.b16 %v312, %v311
      %v339 = vpack.c.b16 %v314, %v313
      %v340 = vpack.c.b16 %v316, %v315
      %v341 = vpack.c.b16 %v318, %v317
      %v342 = vpack.c.b16 %v320, %v319
      %v343 = vpack.c.b16 %v322, %v321
      %v344 = vpack.c.b16 %v324, %v323
      %v345 = vpack.c.b16 %v326, %v325
      %v346 = vpack.c.b16 %v328, %v327
      %v347 = vpack.c.b16 %v330, %v329
      %v348 = vpack.c.b16 %v332, %v331
      %v353 = vunpack.c.l.b16 %v258
      %v354 = vunpack.c.l.b16 %v259
      %v355 = vunpack.c.l.b16 %v260
      %v356 = vunpack.c.l.b16 %v261
      %v357 = vpack.c.b16 %v354, %v353
      %v358 = vpack.c.b16 %v356, %v355
      %vm360 = vcmask 220160
      %v362 = vsel %vm360, %v333, 0
      %v365 = vsel %vm360, %v334, 0
      %v368 = vsel %vm360, %v335, 0
      %v371 = vsel %vm360, %v336, 0
      %v374 = vsel %vm360, %v337, 0
      %v377 = vsel %vm360, %v338, 0
      %v380 = vsel %vm360, %v339, 0
      %v383 = vsel %vm360, %v340, 0
      %v386 = vsel %vm360, %v341, 0
      %v389 = vsel %vm360, %v342, 0
      %v392 = vsel %vm360, %v343, 0
      %v395 = vsel %vm360, %v344, 0
      %v398 = vsel %vm360, %v345, 0
      %v401 = vsel %vm360, %v346, 0
      %v404 = vsel %vm360, %v347, 0
      %v407 = vsel %vm360, %v348, 0
      %vm409 = vcmask 1044480
      %vm410 = vcmask 1045504
      %v411 = vsel %vm409, 4294967295, 65535
      %v412 = vsel %vm410, %v411, 0
      %v414 = vand.u32 %v358, %v412
      %416 = vmatprep.subr.bf16.mxu0 0
      %417 = vmatpush1.bf16.msra.mxu0 0
      %418 = vmatprep.subr.bf16.mxu0 0
      %419 = vmatpush1.bf16.msra.mxu0 0
      %420 = vmatprep.subr.bf16.mxu0 0
      %421 = vmatpush1.bf16.msra.mxu0 0
      %422 = vmatprep.subr.bf16.mxu0 0
      %423 = vmatpush1.bf16.msra.mxu0 0
      %424 = vmatprep.subr.bf16.mxu0 0
      %425 = vmatpush1.bf16.msra.mxu0 0
      %426 = vmatprep.subr.bf16.mxu0 0
      %427 = vmatpush1.bf16.msra.mxu0 0
      %428 = vmatprep.subr.bf16.mxu0 0
      %429 = vmatpush1.bf16.msra.mxu0 %v414
      %430 = vmatprep.subr.bf16.mxu0 0
      %431 = vmatpush1.bf16.msra.mxu0 %v357
      %432 = vmatprep.subr.bf16.mxu0 0
      %433 = vmatpush2.bf16.msra.mxu0 0
      %434 = vmatprep.subr.bf16.mxu0 0
      %435 = vmatpush2.bf16.msra.mxu0 0
      %436 = vmatprep.subr.bf16.mxu0 0
      %437 = vmatpush2.bf16.msra.mxu0 0
      %438 = vmatprep.subr.bf16.mxu0 0
      %439 = vmatpush2.bf16.msra.mxu0 0
      %440 = vmatprep.subr.bf16.mxu0 0
      %441 = vmatpush2.bf16.msra.mxu0 0
      %442 = vmatprep.subr.bf16.mxu0 0
      %443 = vmatpush2.bf16.msra.mxu0 0
      %444 = vmatprep.subr.bf16.mxu0 0
      %445 = vmatpush2.bf16.msra.mxu0 0
      %446 = vmatprep.subr.bf16.mxu0 0
      %447 = vmatpush2.bf16.msra.mxu0 0
      %448 = vmatprep.mubr.bf16.mxu0 0
      %449 = vmatmul.mubr.bf16.gmra.mxu0 %v362
      %v450 = vpop.f32.mrf.mxu0
      %v451 = vadd.f32 %v267, %v450
      %v452 = vpop.f32.mrf.mxu0
      %v453 = vpop.f32.mrf.mxu0
      %v454 = vadd.f32 %v267, %v453
      %v455 = vpop.f32.mrf.mxu0
      %456 = vmatprep.mubr.bf16.mxu0 0
      %457 = vmatmul.mubr.bf16.gmra.mxu0 %v365
      %v458 = vpop.f32.mrf.mxu0
      %v459 = vadd.f32 %v267, %v458
      %v460 = vpop.f32.mrf.mxu0
      %v461 = vpop.f32.mrf.mxu0
      %v462 = vadd.f32 %v267, %v461
      %v463 = vpop.f32.mrf.mxu0
      %464 = vmatprep.mubr.bf16.mxu0 0
      %465 = vmatmul.mubr.bf16.gmra.mxu0 %v368
      %v466 = vpop.f32.mrf.mxu0
      %v467 = vadd.f32 %v267, %v466
      %v468 = vpop.f32.mrf.mxu0
      %v469 = vpop.f32.mrf.mxu0
      %v470 = vadd.f32 %v267, %v469
      %v471 = vpop.f32.mrf.mxu0
      %472 = vmatprep.mubr.bf16.mxu0 0
      %473 = vmatmul.mubr.bf16.gmra.mxu0 %v371
      %v474 = vpop.f32.mrf.mxu0
      %v475 = vadd.f32 %v267, %v474
      %v476 = vpop.f32.mrf.mxu0
      %v477 = vpop.f32.mrf.mxu0
      %v478 = vadd.f32 %v267, %v477
      %v479 = vpop.f32.mrf.mxu0
      %480 = vmatprep.mubr.bf16.mxu0 0
      %481 = vmatmul.mubr.bf16.gmra.mxu0 %v374
      %v482 = vpop.f32.mrf.mxu0
      %v483 = vadd.f32 %v267, %v482
      %v484 = vpop.f32.mrf.mxu0
      %v485 = vpop.f32.mrf.mxu0
      %v486 = vadd.f32 %v267, %v485
      %v487 = vpop.f32.mrf.mxu0
      %488 = vmatprep.mubr.bf16.mxu0 0
      %489 = vmatmul.mubr.bf16.gmra.mxu0 %v377
      %v490 = vpop.f32.mrf.mxu0
      %v491 = vadd.f32 %v267, %v490
      %v492 = vpop.f32.mrf.mxu0
      %v493 = vpop.f32.mrf.mxu0
      %v494 = vadd.f32 %v267, %v493
      %v495 = vpop.f32.mrf.mxu0
      %496 = vmatprep.mubr.bf16.mxu0 0
      %497 = vmatmul.mubr.bf16.gmra.mxu0 %v380
      %v498 = vpop.f32.mrf.mxu0
      %v499 = vadd.f32 %v267, %v498
      %v500 = vpop.f32.mrf.mxu0
      %v501 = vpop.f32.mrf.mxu0
      %v502 = vadd.f32 %v267, %v501
      %v503 = vpop.f32.mrf.mxu0
      %504 = vmatprep.mubr.bf16.mxu0 0
      %505 = vmatmul.mubr.bf16.gmra.mxu0 %v383
      %v506 = vpop.f32.mrf.mxu0
      %v507 = vadd.f32 %v267, %v506
      %v508 = vpop.f32.mrf.mxu0
      %v509 = vpop.f32.mrf.mxu0
      %v510 = vadd.f32 %v267, %v509
      %v511 = vpop.f32.mrf.mxu0
      %512 = vmatprep.mubr.bf16.mxu0 0
      %513 = vmatmul.mubr.bf16.gmra.mxu0 %v386
      %v514 = vpop.f32.mrf.mxu0
      %v515 = vadd.f32 %v267, %v514
      %v516 = vpop.f32.mrf.mxu0
      %v517 = vpop.f32.mrf.mxu0
      %v518 = vadd.f32 %v267, %v517
      %v519 = vpop.f32.mrf.mxu0
      %520 = vmatprep.mubr.bf16.mxu0 0
      %521 = vmatmul.mubr.bf16.gmra.mxu0 %v389
      %v522 = vpop.f32.mrf.mxu0
      %v523 = vadd.f32 %v267, %v522
      %v524 = vpop.f32.mrf.mxu0
      %v525 = vpop.f32.mrf.mxu0
      %v526 = vadd.f32 %v267, %v525
      %v527 = vpop.f32.mrf.mxu0
      %528 = vmatprep.mubr.bf16.mxu0 0
      %529 = vmatmul.mubr.bf16.gmra.mxu0 %v392
      %v530 = vpop.f32.mrf.mxu0
      %v531 = vadd.f32 %v267, %v530
      %v532 = vpop.f32.mrf.mxu0
      %v533 = vpop.f32.mrf.mxu0
      %v534 = vadd.f32 %v267, %v533
      %v535 = vpop.f32.mrf.mxu0
      %536 = vmatprep.mubr.bf16.mxu0 0
      %537 = vmatmul.mubr.bf16.gmra.mxu0 %v395
      %v538 = vpop.f32.mrf.mxu0
      %v539 = vadd.f32 %v267, %v538
      %v540 = vpop.f32.mrf.mxu0
      %v541 = vpop.f32.mrf.mxu0
      %v542 = vadd.f32 %v267, %v541
      %v543 = vpop.f32.mrf.mxu0
      %544 = vmatprep.mubr.bf16.mxu0 0
      %545 = vmatmul.mubr.bf16.gmra.mxu0 %v398
      %v546 = vpop.f32.mrf.mxu0
      %v547 = vadd.f32 %v267, %v546
      %v548 = vpop.f32.mrf.mxu0
      %v549 = vpop.f32.mrf.mxu0
      %v550 = vadd.f32 %v267, %v549
      %v551 = vpop.f32.mrf.mxu0
      %552 = vmatprep.mubr.bf16.mxu0 0
      %553 = vmatmul.mubr.bf16.gmra.mxu0 %v401
      %v554 = vpop.f32.mrf.mxu0
      %v555 = vadd.f32 %v267, %v554
      %v556 = vpop.f32.mrf.mxu0
      %v557 = vpop.f32.mrf.mxu0
      %v558 = vadd.f32 %v267, %v557
      %v559 = vpop.f32.mrf.mxu0
      %560 = vmatprep.mubr.bf16.mxu0 0
      %561 = vmatmul.mubr.bf16.gmra.mxu0 %v404
      %v562 = vpop.f32.mrf.mxu0
      %v563 = vadd.f32 %v267, %v562
      %v564 = vpop.f32.mrf.mxu0
      %v565 = vpop.f32.mrf.mxu0
      %v566 = vadd.f32 %v267, %v565
      %v567 = vpop.f32.mrf.mxu0
      %568 = vmatprep.mubr.bf16.mxu0 0
      %569 = vmatmul.mubr.bf16.gmra.mxu0 %v407
      %v570 = vpop.f32.mrf.mxu0
      %v571 = vadd.f32 %v267, %v570
      %v572 = vpop.f32.mrf.mxu0
      %v573 = vpop.f32.mrf.mxu0
      %v574 = vadd.f32 %v267, %v573
      %v575 = vpop.f32.mrf.mxu0
      %576 = vdwg.mxu0
      %v577 = vxor.u32 %v451, 2147483648
      %v578 = vxor.u32 %v454, 2147483648
      %v579 = vxor.u32 %v459, 2147483648
      %v580 = vxor.u32 %v462, 2147483648
      %v581 = vxor.u32 %v467, 2147483648
      %v582 = vxor.u32 %v470, 2147483648
      %v583 = vxor.u32 %v475, 2147483648
      %v584 = vxor.u32 %v478, 2147483648
      %v585 = vxor.u32 %v483, 2147483648
      %v586 = vxor.u32 %v486, 2147483648
      %v587 = vxor.u32 %v491, 2147483648
      %v588 = vxor.u32 %v494, 2147483648
      %v589 = vxor.u32 %v499, 2147483648
      %v590 = vxor.u32 %v502, 2147483648
      %v591 = vxor.u32 %v507, 2147483648
      %v592 = vxor.u32 %v510, 2147483648
      %v593 = vxor.u32 %v515, 2147483648
      %v594 = vxor.u32 %v518, 2147483648
      %v595 = vxor.u32 %v523, 2147483648
      %v596 = vxor.u32 %v526, 2147483648
      %v597 = vxor.u32 %v531, 2147483648
      %v598 = vxor.u32 %v534, 2147483648
      %v599 = vxor.u32 %v539, 2147483648
      %v600 = vxor.u32 %v542, 2147483648
      %v601 = vxor.u32 %v547, 2147483648
      %v602 = vxor.u32 %v550, 2147483648
      %v603 = vxor.u32 %v555, 2147483648
      %v604 = vxor.u32 %v558, 2147483648
      %v605 = vxor.u32 %v563, 2147483648
      %v606 = vxor.u32 %v566, 2147483648
      %v607 = vxor.u32 %v571, 2147483648
      %v608 = vxor.u32 %v574, 2147483648
      %v609 = vmul.f32 %v577, 1.442695
      %v610 = vpow.pop %v609
      %v611 = vmul.f32 %v578, 1.442695
      %v612 = vpow.pop %v611
      %v613 = vmul.f32 %v579, 1.442695
      %v614 = vpow.pop %v613
      %v615 = vmul.f32 %v580, 1.442695
      %v616 = vpow.pop %v615
      %v617 = vmul.f32 %v581, 1.442695
      %v618 = vpow.pop %v617
      %v619 = vmul.f32 %v582, 1.442695
      %v620 = vpow.pop %v619
      %v621 = vmul.f32 %v583, 1.442695
      %v622 = vpow.pop %v621
      %v623 = vmul.f32 %v584, 1.442695
      %v624 = vpow.pop %v623
      %v625 = vmul.f32 %v585, 1.442695
      %v626 = vpow.pop %v625
      %v627 = vmul.f32 %v586, 1.442695
      %v628 = vpow.pop %v627
      %v629 = vmul.f32 %v587, 1.442695
      %v630 = vpow.pop %v629
      %v631 = vmul.f32 %v588, 1.442695
      %v632 = vpow.pop %v631
      %v633 = vmul.f32 %v589, 1.442695
      %v634 = vpow.pop %v633
      %v635 = vmul.f32 %v590, 1.442695
      %v636 = vpow.pop %v635
      %v637 = vmul.f32 %v591, 1.442695
      %v638 = vpow.pop %v637
      %v639 = vmul.f32 %v592, 1.442695
      %v640 = vpow.pop %v639
      %v641 = vmul.f32 %v593, 1.442695
      %v642 = vpow.pop %v641
      %v643 = vmul.f32 %v594, 1.442695
      %v644 = vpow.pop %v643
      %v645 = vmul.f32 %v595, 1.442695
      %v646 = vpow.pop %v645
      %v647 = vmul.f32 %v596, 1.442695
      %v648 = vpow.pop %v647
      %v649 = vmul.f32 %v597, 1.442695
      %v650 = vpow.pop %v649
      %v651 = vmul.f32 %v598, 1.442695
      %v652 = vpow.pop %v651
      %v653 = vmul.f32 %v599, 1.442695
      %v654 = vpow.pop %v653
      %v655 = vmul.f32 %v600, 1.442695
      %v656 = vpow.pop %v655
      %v657 = vmul.f32 %v601, 1.442695
      %v658 = vpow.pop %v657
      %v659 = vmul.f32 %v602, 1.442695
      %v660 = vpow.pop %v659
      %v661 = vmul.f32 %v603, 1.442695
      %v662 = vpow.pop %v661
      %v663 = vmul.f32 %v604, 1.442695
      %v664 = vpow.pop %v663
      %v665 = vmul.f32 %v605, 1.442695
      %v666 = vpow.pop %v665
      %v667 = vmul.f32 %v606, 1.442695
      %v668 = vpow.pop %v667
      %v669 = vmul.f32 %v607, 1.442695
      %v670 = vpow.pop %v669
      %v671 = vmul.f32 %v608, 1.442695
      %v672 = vpow.pop %v671
      %v673 = vadd.f32 %v610, 1.0
      %v674 = vadd.f32 %v612, 1.0
      %v675 = vadd.f32 %v614, 1.0
      %v676 = vadd.f32 %v616, 1.0
      %v677 = vadd.f32 %v618, 1.0
      %v678 = vadd.f32 %v620, 1.0
      %v679 = vadd.f32 %v622, 1.0
      %v680 = vadd.f32 %v624, 1.0
      %v681 = vadd.f32 %v626, 1.0
      %v682 = vadd.f32 %v628, 1.0
      %v683 = vadd.f32 %v630, 1.0
      %v684 = vadd.f32 %v632, 1.0
      %v685 = vadd.f32 %v634, 1.0
      %v686 = vadd.f32 %v636, 1.0
      %v687 = vadd.f32 %v638, 1.0
      %v688 = vadd.f32 %v640, 1.0
      %v689 = vadd.f32 %v642, 1.0
      %v690 = vadd.f32 %v644, 1.0
      %v691 = vadd.f32 %v646, 1.0
      %v692 = vadd.f32 %v648, 1.0
      %v693 = vadd.f32 %v650, 1.0
      %v694 = vadd.f32 %v652, 1.0
      %v695 = vadd.f32 %v654, 1.0
      %v696 = vadd.f32 %v656, 1.0
      %v697 = vadd.f32 %v658, 1.0
      %v698 = vadd.f32 %v660, 1.0
      %v699 = vadd.f32 %v662, 1.0
      %v700 = vadd.f32 %v664, 1.0
      %v701 = vadd.f32 %v666, 1.0
      %v702 = vadd.f32 %v668, 1.0
      %v703 = vadd.f32 %v670, 1.0
      %v704 = vadd.f32 %v672, 1.0
      %v705 = vrcp.pop %v673
      %v706 = vmul.f32 1.0, %v705
      %v707 = vrcp.pop %v674
      %v708 = vmul.f32 1.0, %v707
      %v709 = vrcp.pop %v675
      %v710 = vmul.f32 1.0, %v709
      %v711 = vrcp.pop %v676
      %v712 = vmul.f32 1.0, %v711
      %v713 = vrcp.pop %v677
      %v714 = vmul.f32 1.0, %v713
      %v715 = vrcp.pop %v678
      %v716 = vmul.f32 1.0, %v715
      %v717 = vrcp.pop %v679
      %v718 = vmul.f32 1.0, %v717
      %v719 = vrcp.pop %v680
      %v720 = vmul.f32 1.0, %v719
      %v721 = vrcp.pop %v681
      %v722 = vmul.f32 1.0, %v721
      %v723 = vrcp.pop %v682
      %v724 = vmul.f32 1.0, %v723
      %v725 = vrcp.pop %v683
      %v726 = vmul.f32 1.0, %v725
      %v727 = vrcp.pop %v684
      %v728 = vmul.f32 1.0, %v727
      %v729 = vrcp.pop %v685
      %v730 = vmul.f32 1.0, %v729
      %v731 = vrcp.pop %v686
      %v732 = vmul.f32 1.0, %v731
      %v733 = vrcp.pop %v687
      %v734 = vmul.f32 1.0, %v733
      %v735 = vrcp.pop %v688
      %v736 = vmul.f32 1.0, %v735
      %v737 = vrcp.pop %v689
      %v738 = vmul.f32 1.0, %v737
      %v739 = vrcp.pop %v690
      %v740 = vmul.f32 1.0, %v739
      %v741 = vrcp.pop %v691
      %v742 = vmul.f32 1.0, %v741
      %v743 = vrcp.pop %v692
      %v744 = vmul.f32 1.0, %v743
      %v745 = vrcp.pop %v693
      %v746 = vmul.f32 1.0, %v745
      %v747 = vrcp.pop %v694
      %v748 = vmul.f32 1.0, %v747
      %v749 = vrcp.pop %v695
      %v750 = vmul.f32 1.0, %v749
      %v751 = vrcp.pop %v696
      %v752 = vmul.f32 1.0, %v751
      %v753 = vrcp.pop %v697
      %v754 = vmul.f32 1.0, %v753
      %v755 = vrcp.pop %v698
      %v756 = vmul.f32 1.0, %v755
      %v757 = vrcp.pop %v699
      %v758 = vmul.f32 1.0, %v757
      %v759 = vrcp.pop %v700
      %v760 = vmul.f32 1.0, %v759
      %v761 = vrcp.pop %v701
      %v762 = vmul.f32 1.0, %v761
      %v763 = vrcp.pop %v702
      %v764 = vmul.f32 1.0, %v763
      %v765 = vrcp.pop %v703
      %v766 = vmul.f32 1.0, %v765
      %v767 = vrcp.pop %v704
      %v768 = vmul.f32 1.0, %v767
      %v769 = vmul.f32 %v451, %v706
      %v770 = vmul.f32 %v454, %v708
      %v771 = vmul.f32 %v459, %v710
      %v772 = vmul.f32 %v462, %v712
      %v773 = vmul.f32 %v467, %v714
      %v774 = vmul.f32 %v470, %v716
      %v775 = vmul.f32 %v475, %v718
      %v776 = vmul.f32 %v478, %v720
      %v777 = vmul.f32 %v483, %v722
      %v778 = vmul.f32 %v486, %v724
      %v779 = vmul.f32 %v491, %v726
      %v780 = vmul.f32 %v494, %v728
      %v781 = vmul.f32 %v499, %v730
      %v782 = vmul.f32 %v502, %v732
      %v783 = vmul.f32 %v507, %v734
      %v784 = vmul.f32 %v510, %v736
      %v785 = vmul.f32 %v515, %v738
      %v786 = vmul.f32 %v518, %v740
      %v787 = vmul.f32 %v523, %v742
      %v788 = vmul.f32 %v526, %v744
      %v789 = vmul.f32 %v531, %v746
      %v790 = vmul.f32 %v534, %v748
      %v791 = vmul.f32 %v539, %v750
      %v792 = vmul.f32 %v542, %v752
      %v793 = vmul.f32 %v547, %v754
      %v794 = vmul.f32 %v550, %v756
      %v795 = vmul.f32 %v555, %v758
      %v796 = vmul.f32 %v558, %v760
      %v797 = vmul.f32 %v563, %v762
      %v798 = vmul.f32 %v566, %v764
      %v799 = vmul.f32 %v571, %v766
      %v800 = vmul.f32 %v574, %v768
      %v801 = vpack.c.bf16 %v770, %v769
      %v802 = vpack.c.bf16 %v772, %v771
      %v803 = vpack.c.bf16 %v774, %v773
      %v804 = vpack.c.bf16 %v776, %v775
      %v805 = vpack.c.bf16 %v778, %v777
      %v806 = vpack.c.bf16 %v780, %v779
      %v807 = vpack.c.bf16 %v782, %v781
      %v808 = vpack.c.bf16 %v784, %v783
      %v809 = vpack.c.bf16 %v786, %v785
      %v810 = vpack.c.bf16 %v788, %v787
      %v811 = vpack.c.bf16 %v790, %v789
      %v812 = vpack.c.bf16 %v792, %v791
      %v813 = vpack.c.bf16 %v794, %v793
      %v814 = vpack.c.bf16 %v796, %v795
      %v815 = vpack.c.bf16 %v798, %v797
      %v816 = vpack.c.bf16 %v800, %v799
      %v833 = vunpack.c.l.b16 %v801
      %v834 = vunpack.c.h.b16 %v801
      %v835 = vunpack.c.l.b16 %v802
      %v836 = vunpack.c.h.b16 %v802
      %v837 = vunpack.c.l.b16 %v803
      %v838 = vunpack.c.h.b16 %v803
      %v839 = vunpack.c.l.b16 %v804
      %v840 = vunpack.c.h.b16 %v804
      %v841 = vunpack.c.l.b16 %v805
      %v842 = vunpack.c.h.b16 %v805
      %v843 = vunpack.c.l.b16 %v806
      %v844 = vunpack.c.h.b16 %v806
      %v845 = vunpack.c.l.b16 %v807
      %v846 = vunpack.c.h.b16 %v807
      %v847 = vunpack.c.l.b16 %v808
      %v848 = vunpack.c.h.b16 %v808
      %v849 = vunpack.c.l.b16 %v809
      %v850 = vunpack.c.h.b16 %v809
      %v851 = vunpack.c.l.b16 %v810
      %v852 = vunpack.c.h.b16 %v810
      %v853 = vunpack.c.l.b16 %v811
      %v854 = vunpack.c.h.b16 %v811
      %v855 = vunpack.c.l.b16 %v812
      %v856 = vunpack.c.h.b16 %v812
      %v857 = vunpack.c.l.b16 %v813
      %v858 = vunpack.c.h.b16 %v813
      %v859 = vunpack.c.l.b16 %v814
      %v860 = vunpack.c.h.b16 %v814
      %v861 = vunpack.c.l.b16 %v815
      %v862 = vunpack.c.h.b16 %v815
      %v863 = vunpack.c.l.b16 %v816
      %v864 = vunpack.c.h.b16 %v816
      %v865 = vpack.c.b16 %v833, %v833
      %v866 = vpack.c.b16 %v834, %v834
      %v867 = vpack.c.b16 %v835, %v835
      %v868 = vpack.c.b16 %v836, %v836
      %v869 = vpack.c.b16 %v837, %v837
      %v870 = vpack.c.b16 %v838, %v838
      %v871 = vpack.c.b16 %v839, %v839
      %v872 = vpack.c.b16 %v840, %v840
      %v873 = vpack.c.b16 %v841, %v841
      %v874 = vpack.c.b16 %v842, %v842
      %v875 = vpack.c.b16 %v843, %v843
      %v876 = vpack.c.b16 %v844, %v844
      %v877 = vpack.c.b16 %v845, %v845
      %v878 = vpack.c.b16 %v846, %v846
      %v879 = vpack.c.b16 %v847, %v847
      %v880 = vpack.c.b16 %v848, %v848
      %v881 = vpack.c.b16 %v849, %v849
      %v882 = vpack.c.b16 %v850, %v850
      %v883 = vpack.c.b16 %v851, %v851
      %v884 = vpack.c.b16 %v852, %v852
      %v885 = vpack.c.b16 %v853, %v853
      %v886 = vpack.c.b16 %v854, %v854
      %v887 = vpack.c.b16 %v855, %v855
      %v888 = vpack.c.b16 %v856, %v856
      %v889 = vpack.c.b16 %v857, %v857
      %v890 = vpack.c.b16 %v858, %v858
      %v891 = vpack.c.b16 %v859, %v859
      %v892 = vpack.c.b16 %v860, %v860
      %v893 = vpack.c.b16 %v861, %v861
      %v894 = vpack.c.b16 %v862, %v862
      %v895 = vpack.c.b16 %v863, %v863
      %v896 = vpack.c.b16 %v864, %v864
      %vm929 = vcmask 191488
      %930 = vst.msk [vmem:[%s223] sm:$0xf] %vm929, %v865
      %931 = vst.msk [vmem:[%s223 + $0x4] sm:$0xf] %vm929, %v866
      %932 = vst.msk [vmem:[%s223 + $0x8] sm:$0xf] %vm929, %v867
      %933 = vst.msk [vmem:[%s223 + $0xc] sm:$0xf] %vm929, %v868
      %934 = vst.msk [vmem:[%s223 + $0x10] sm:$0xf] %vm929, %v869
      %935 = vst.msk [vmem:[%s223 + $0x14] sm:$0xf] %vm929, %v870
      %936 = vst.msk [vmem:[%s223 + $0x18] sm:$0xf] %vm929, %v871
      %937 = vst.msk [vmem:[%s223 + $0x1c] sm:$0xf] %vm929, %v872
      %938 = vst.msk [vmem:[%s223 + $0x20] sm:$0xf] %vm929, %v873
      %939 = vst.msk [vmem:[%s223 + $0x24] sm:$0xf] %vm929, %v874
      %940 = vst.msk [vmem:[%s223 + $0x28] sm:$0xf] %vm929, %v875
      %941 = vst.msk [vmem:[%s223 + $0x2c] sm:$0xf] %vm929, %v876
      %942 = vst.msk [vmem:[%s223 + $0x30] sm:$0xf] %vm929, %v877
      %943 = vst.msk [vmem:[%s223 + $0x34] sm:$0xf] %vm929, %v878
      %944 = vst.msk [vmem:[%s223 + $0x38] sm:$0xf] %vm929, %v879
      %945 = vst.msk [vmem:[%s223 + $0x3c] sm:$0xf] %vm929, %v880
      %946 = vst.msk [vmem:[%s223 + $0x40] sm:$0xf] %vm929, %v881
      %947 = vst.msk [vmem:[%s223 + $0x44] sm:$0xf] %vm929, %v882
      %948 = vst.msk [vmem:[%s223 + $0x48] sm:$0xf] %vm929, %v883
      %949 = vst.msk [vmem:[%s223 + $0x4c] sm:$0xf] %vm929, %v884
      %950 = vst.msk [vmem:[%s223 + $0x50] sm:$0xf] %vm929, %v885
      %951 = vst.msk [vmem:[%s223 + $0x54] sm:$0xf] %vm929, %v886
      %952 = vst.msk [vmem:[%s223 + $0x58] sm:$0xf] %vm929, %v887
      %953 = vst.msk [vmem:[%s223 + $0x5c] sm:$0xf] %vm929, %v888
      %954 = vst.msk [vmem:[%s223 + $0x60] sm:$0xf] %vm929, %v889
      %955 = vst.msk [vmem:[%s223 + $0x64] sm:$0xf] %vm929, %v890
      %956 = vst.msk [vmem:[%s223 + $0x68] sm:$0xf] %vm929, %v891
      %957 = vst.msk [vmem:[%s223 + $0x6c] sm:$0xf] %vm929, %v892
      %958 = vst.msk [vmem:[%s223 + $0x70] sm:$0xf] %vm929, %v893
      %959 = vst.msk [vmem:[%s223 + $0x74] sm:$0xf] %vm929, %v894
      %960 = vst.msk [vmem:[%s223 + $0x78] sm:$0xf] %vm929, %v895
      %961 = vst.msk [vmem:[%s223 + $0x7c] sm:$0xf] %vm929, %v896
      %s962 = smul.u32 32, %s18
      %p963 = scmp.lt.s32.totalorder %s962, 63
      %s964 = scalar_select %p963, %s962, 63
      %p965 = scmp.lt.s32.totalorder %s19, 0
      %s966 = scalar_select %p965, %s19, 0
      %s967 = sadd.s32 %s966, %s964
      %s968 = smul.addr %s967, 4
      %s969 = scalar_lea.vmem %s3, %s968
      // Predicated region
      $region33: #{tpu_custom_call.1} parent=31 // pred_check
        %p970 = pneg %p124
      $region34: #{tpu_custom_call.1} parent=31 // pred_check_branch
        %972 = sbr.rel (%p970) target = $region36
      $region35: #{tpu_custom_call.1} parent=31 // pred_region
        %s973 = smul.u32 32, %s18
      $region36: #{tpu_custom_call.1} parent=31 // pred_fallthru
        _
    $region32: #{tpu_custom_call.1} parent=5 // pred_fallthru
      _
    %p974 = scmp.le.s32.totalorder 2, %s9
    // Predicated region
    $region37: #{tpu_custom_call.1} parent=5 // pred_check
      %p975 = pneg %p974
    $region38: #{tpu_custom_call.1} parent=5 // pred_check_branch
      %977 = sbr.rel (%p975) target = $region40
    $region39: #{tpu_custom_call.1} parent=5 // pred_region
      %s978 = ssub.s32 %s9, 2
      // Predicated region
      $region41: #{tpu_custom_call.1} parent=39 // pred_check
        %p979 = pneg %p130
      $region42: #{tpu_custom_call.1} parent=39 // pred_check_branch
        %981 = sbr.rel (%p979) target = $region44
      $region43: #{tpu_custom_call.1} parent=39 // pred_region
        %s982 = smul.u32 32, %s20
        %p983 = scmp.lt.s32.totalorder %s982, 63
        %s984 = scalar_select %p983, %s982, 63
        %p985 = scmp.lt.s32.totalorder %s21, 0
        %s986 = scalar_select %p985, %s21, 0
        %s987 = sadd.s32 %s986, %s984
        %s988 = smul.addr %s987, 4
        %s989 = scalar_lea.vmem %s3, %s988
      $region44: #{tpu_custom_call.1} parent=39 // pred_fallthru
        _
    $region40: #{tpu_custom_call.1} parent=5 // pred_fallthru
      _
  $region6: #{tpu_custom_call.1} parent=0 // loop_footer
    %s13 = sadd.s32 1, %s9
  $region7: #{tpu_custom_call.1} parent=0 // loop_footer_branch
    %8 = sbr.rel target = $region3
  $region8: #{tpu_custom_call.1} parent=0 // loop_exit
    _

</llo_original>
